<compile_context>
chip_gen: v5e
topology: v5e:2x2
jax: 0.10.0
libtpu: 0.0.40
codegen_flags: <defaults>
</compile_context>

<pallas_src>
import jax
import jax.numpy as jnp
from jax.experimental import pallas as pl
from jax.experimental.pallas import tpu as pltpu

EPS = 1e-3     # epsilon default of CharbonnierPenalty.forward
ALPHA = 0.4    # alpha default of CharbonnierPenalty.forward


def smoothness_kernel(fx_ref, fy_ref, o_ref):
    fx = fx_ref[...]          # (TB, H, W) block: TB batch elements per grid step
    fy = fy_ref[...]
    _, H, W = fx.shape

    # Hoisted per-axis index masks / scales, reused for both flow components.
    idx_h = jax.lax.broadcasted_iota(jnp.int32, fx.shape, 1)
    idx_w = jax.lax.broadcasted_iota(jnp.int32, fx.shape, 2)
    first_h, last_h = idx_h == 0, idx_h == H - 1
    first_w, last_w = idx_w == 0, idx_w == W - 1
    # Edge rows/cols use one-sided diff (scale 1.0); interior uses central (scale 0.5).
    scale_h = jnp.where(first_h | last_h, jnp.float32(1.0), jnp.float32(0.5))
    scale_w = jnp.where(first_w | last_w, jnp.float32(1.0), jnp.float32(0.5))

    def grad(x, axis, n, first, last, scale):
        # x[min(i+1, n-1)]: circular roll by -1 == roll by n-1 (pltpu.roll needs shift >= 0).
        upper = jnp.where(last, x, pltpu.roll(x, shift=n - 1, axis=axis))
        # x[max(i-1, 0)]
        lower = jnp.where(first, x, pltpu.roll(x, shift=1, axis=axis))
        return (upper - lower) * scale        # multiply, not divide (no EUP reciprocal)

    def charbonnier(g):
        return (g * g + jnp.float32(EPS * EPS)) ** jnp.float32(ALPHA)

    out = (charbonnier(grad(fx, 1, H, first_h, last_h, scale_h))    # dVx/dx (axis=1)
           + charbonnier(grad(fx, 2, W, first_w, last_w, scale_w))  # dVx/dy (axis=2)
           + charbonnier(grad(fy, 1, H, first_h, last_h, scale_h))  # dVy/dx
           + charbonnier(grad(fy, 2, W, first_w, last_w, scale_w))) # dVy/dy
    o_ref[...] = out.astype(o_ref.dtype)


def smoothness_loss(flow_x, flow_y, *, block_bytes_budget=4 * 1024 * 1024):
    B, H, W = flow_x.shape
    frame_bytes = H * W * 4  # f32

    # Fold as many batch elements as fit a ~4 MiB per-ref block budget, picking a
    # divisor of B so every grid step sees a full block.
    tb = max(1, min(B, block_bytes_budget // max(frame_bytes, 1)))
    while B % tb != 0:
        tb -= 1
    grid = (B // tb,)
    # TODO(synk): for frames where a single (1, H, W) f32 block exceeds the VMEM
    # budget (e.g. very large HD flow on v7x/v5e), add an H-tiling grid axis with a
    # 1-row halo (overlapping windows) for the H-direction gradient.

    spec = pl.BlockSpec((tb, H, W), lambda b: (b, 0, 0))

    # 3 refs (fx, fy, out), each double-buffered by the pipeline.
    needed = 3 * 2 * tb * frame_bytes
    vmem_limit = int(min(100 * 1024 * 1024, max(needed + (2 << 20), 16 * 1024 * 1024)))

    return pl.pallas_call(
        smoothness_kernel,
        out_shape=jax.ShapeDtypeStruct((B, H, W), jnp.float32),
        grid=grid,
        in_specs=[spec, spec],
        out_specs=spec,
        compiler_params=pltpu.CompilerParams(
            dimension_semantics=("parallel",),
            vmem_limit_bytes=vmem_limit,
        ),
    )(flow_x, flow_y)


if __name__ == "__main__":
    key = jax.random.PRNGKey(0)
    k1, k2 = jax.random.split(key)
    B, H, W = 2, 16, 16
    flow_x = jax.random.normal(k1, (B, H, W), dtype=jnp.float32)
    flow_y = jax.random.normal(k2, (B, H, W), dtype=jnp.float32)

    out = jax.block_until_ready(smoothness_loss(flow_x, flow_y))

    # Pure-JAX reference (jnp.gradient matches torch.gradient with edge_order=1).
    def cp(x):
        return (x ** 2 + EPS ** 2) ** ALPHA

    ref = (cp(jnp.gradient(flow_x, axis=1)) + cp(jnp.gradient(flow_x, axis=2))
           + cp(jnp.gradient(flow_y, axis=1)) + cp(jnp.gradient(flow_y, axis=2)))

    assert out.shape == (B, H, W) and out.dtype == jnp.float32
    assert jnp.allclose(out, ref, atol=1e-5, rtol=1e-5), "mismatch vs reference"
    print("KERNEL_OK")
</pallas_src>

<mosaic_0001>
module attributes {stable_mosaic.version = 11 : i64} {
  func.func @smoothness_kernel(%arg0: i32, %arg1: memref<2x16x16xf32, #tpu.memory_space<vmem>>, %arg2: memref<2x16x16xf32, #tpu.memory_space<vmem>>, %arg3: memref<2x16x16xf32, #tpu.memory_space<vmem>>) attributes {dimension_semantics = [#tpu.dimension_semantics<parallel>], iteration_bounds = array<i64: 1>, scalar_prefetch = 0 : i64, scratch_operands = 0 : i64, tpu.core_type = #tpu.core_type<tc>, window_params = [{transform_indices = @transform_0, window_bounds = array<i64: 2, 16, 16>}, {transform_indices = @transform_1, window_bounds = array<i64: 2, 16, 16>}, {transform_indices = @transform_2, window_bounds = array<i64: 2, 16, 16>}]} {
    %c0 = arith.constant 0 : index
    %c0_0 = arith.constant 0 : index
    %c0_1 = arith.constant 0 : index
    %0 = vector.load %arg1[%c0, %c0_0, %c0_1] : memref<2x16x16xf32, #tpu.memory_space<vmem>>, vector<2x16x16xf32>
    %c0_2 = arith.constant 0 : index
    %c0_3 = arith.constant 0 : index
    %c0_4 = arith.constant 0 : index
    %1 = vector.load %arg2[%c0_2, %c0_3, %c0_4] : memref<2x16x16xf32, #tpu.memory_space<vmem>>, vector<2x16x16xf32>
    %2 = tpu.iota {dimensions = array<i32: 1>} : vector<2x16x16xi32>
    %3 = tpu.iota {dimensions = array<i32: 2>} : vector<2x16x16xi32>
    %c0_i32 = arith.constant 0 : i32
    %4 = vector.broadcast %c0_i32 : i32 to vector<2x16x16xi32>
    %5 = arith.cmpi eq, %2, %4 : vector<2x16x16xi32>
    %c15_i32 = arith.constant 15 : i32
    %6 = vector.broadcast %c15_i32 : i32 to vector<2x16x16xi32>
    %7 = arith.cmpi eq, %2, %6 : vector<2x16x16xi32>
    %c0_i32_5 = arith.constant 0 : i32
    %8 = vector.broadcast %c0_i32_5 : i32 to vector<2x16x16xi32>
    %9 = arith.cmpi eq, %3, %8 : vector<2x16x16xi32>
    %c15_i32_6 = arith.constant 15 : i32
    %10 = vector.broadcast %c15_i32_6 : i32 to vector<2x16x16xi32>
    %11 = arith.cmpi eq, %3, %10 : vector<2x16x16xi32>
    %12 = arith.ori %5, %7 : vector<2x16x16xi1>
    %cst = arith.constant 1.000000e+00 : f32
    %cst_7 = arith.constant 5.000000e-01 : f32
    %13 = vector.broadcast %cst : f32 to vector<2x16x16xf32>
    %14 = vector.broadcast %cst_7 : f32 to vector<2x16x16xf32>
    %15 = arith.select %12, %13, %14 : vector<2x16x16xi1>, vector<2x16x16xf32>
    %16 = arith.ori %9, %11 : vector<2x16x16xi1>
    %cst_8 = arith.constant 1.000000e+00 : f32
    %cst_9 = arith.constant 5.000000e-01 : f32
    %17 = vector.broadcast %cst_8 : f32 to vector<2x16x16xf32>
    %18 = vector.broadcast %cst_9 : f32 to vector<2x16x16xf32>
    %19 = arith.select %16, %17, %18 : vector<2x16x16xi1>, vector<2x16x16xf32>
    %c15_i32_10 = arith.constant 15 : i32
    %20 = tpu.dynamic_rotate %0 by %c15_i32_10 dim 1 : vector<2x16x16xf32>, i32 -> vector<2x16x16xf32>
    %21 = arith.select %7, %0, %20 : vector<2x16x16xi1>, vector<2x16x16xf32>
    %c1_i32 = arith.constant 1 : i32
    %22 = tpu.dynamic_rotate %0 by %c1_i32 dim 1 : vector<2x16x16xf32>, i32 -> vector<2x16x16xf32>
    %23 = arith.select %5, %0, %22 : vector<2x16x16xi1>, vector<2x16x16xf32>
    %24 = arith.subf %21, %23 : vector<2x16x16xf32>
    %25 = arith.mulf %24, %15 : vector<2x16x16xf32>
    %26 = arith.mulf %25, %25 : vector<2x16x16xf32>
    %cst_11 = arith.constant 9.99999997E-7 : f32
    %27 = vector.broadcast %cst_11 : f32 to vector<2x16x16xf32>
    %28 = arith.addf %26, %27 : vector<2x16x16xf32>
    %cst_12 = arith.constant 4.000000e-01 : f32
    %29 = vector.broadcast %cst_12 : f32 to vector<2x16x16xf32>
    %30 = math.powf %28, %29 : vector<2x16x16xf32>
    %c15_i32_13 = arith.constant 15 : i32
    %31 = tpu.dynamic_rotate %0 by %c15_i32_13 dim 2 : vector<2x16x16xf32>, i32 -> vector<2x16x16xf32>
    %32 = arith.select %11, %0, %31 : vector<2x16x16xi1>, vector<2x16x16xf32>
    %c1_i32_14 = arith.constant 1 : i32
    %33 = tpu.dynamic_rotate %0 by %c1_i32_14 dim 2 : vector<2x16x16xf32>, i32 -> vector<2x16x16xf32>
    %34 = arith.select %9, %0, %33 : vector<2x16x16xi1>, vector<2x16x16xf32>
    %35 = arith.subf %32, %34 : vector<2x16x16xf32>
    %36 = arith.mulf %35, %19 : vector<2x16x16xf32>
    %37 = arith.mulf %36, %36 : vector<2x16x16xf32>
    %cst_15 = arith.constant 9.99999997E-7 : f32
    %38 = vector.broadcast %cst_15 : f32 to vector<2x16x16xf32>
    %39 = arith.addf %37, %38 : vector<2x16x16xf32>
    %cst_16 = arith.constant 4.000000e-01 : f32
    %40 = vector.broadcast %cst_16 : f32 to vector<2x16x16xf32>
    %41 = math.powf %39, %40 : vector<2x16x16xf32>
    %42 = arith.addf %30, %41 : vector<2x16x16xf32>
    %c15_i32_17 = arith.constant 15 : i32
    %43 = tpu.dynamic_rotate %1 by %c15_i32_17 dim 1 : vector<2x16x16xf32>, i32 -> vector<2x16x16xf32>
    %44 = arith.select %7, %1, %43 : vector<2x16x16xi1>, vector<2x16x16xf32>
    %c1_i32_18 = arith.constant 1 : i32
    %45 = tpu.dynamic_rotate %1 by %c1_i32_18 dim 1 : vector<2x16x16xf32>, i32 -> vector<2x16x16xf32>
    %46 = arith.select %5, %1, %45 : vector<2x16x16xi1>, vector<2x16x16xf32>
    %47 = arith.subf %44, %46 : vector<2x16x16xf32>
    %48 = arith.mulf %47, %15 : vector<2x16x16xf32>
    %49 = arith.mulf %48, %48 : vector<2x16x16xf32>
    %cst_19 = arith.constant 9.99999997E-7 : f32
    %50 = vector.broadcast %cst_19 : f32 to vector<2x16x16xf32>
    %51 = arith.addf %49, %50 : vector<2x16x16xf32>
    %cst_20 = arith.constant 4.000000e-01 : f32
    %52 = vector.broadcast %cst_20 : f32 to vector<2x16x16xf32>
    %53 = math.powf %51, %52 : vector<2x16x16xf32>
    %54 = arith.addf %42, %53 : vector<2x16x16xf32>
    %c15_i32_21 = arith.constant 15 : i32
    %55 = tpu.dynamic_rotate %1 by %c15_i32_21 dim 2 : vector<2x16x16xf32>, i32 -> vector<2x16x16xf32>
    %56 = arith.select %11, %1, %55 : vector<2x16x16xi1>, vector<2x16x16xf32>
    %c1_i32_22 = arith.constant 1 : i32
    %57 = tpu.dynamic_rotate %1 by %c1_i32_22 dim 2 : vector<2x16x16xf32>, i32 -> vector<2x16x16xf32>
    %58 = arith.select %9, %1, %57 : vector<2x16x16xi1>, vector<2x16x16xf32>
    %59 = arith.subf %56, %58 : vector<2x16x16xf32>
    %60 = arith.mulf %59, %19 : vector<2x16x16xf32>
    %61 = arith.mulf %60, %60 : vector<2x16x16xf32>
    %cst_23 = arith.constant 9.99999997E-7 : f32
    %62 = vector.broadcast %cst_23 : f32 to vector<2x16x16xf32>
    %63 = arith.addf %61, %62 : vector<2x16x16xf32>
    %cst_24 = arith.constant 4.000000e-01 : f32
    %64 = vector.broadcast %cst_24 : f32 to vector<2x16x16xf32>
    %65 = math.powf %63, %64 : vector<2x16x16xf32>
    %66 = arith.addf %54, %65 : vector<2x16x16xf32>
    %c0_25 = arith.constant 0 : index
    %c0_26 = arith.constant 0 : index
    %c0_27 = arith.constant 0 : index
    %67 = vector.load %arg3[%c0_25, %c0_26, %c0_27] : memref<2x16x16xf32, #tpu.memory_space<vmem>>, vector<2x16x16xf32>
    tpu.vector_store %arg3[%c0_25, %c0_26, %c0_27], %66 {strides = array<i32>} : memref<2x16x16xf32, #tpu.memory_space<vmem>>, vector<2x16x16xf32>,
    return
  }
  func.func @transform_0(%arg0: i32) -> (i32, i32, i32) {
    %c0_i32 = arith.constant 0 : i32
    %c0_i32_0 = arith.constant 0 : i32
    %c0_i32_1 = arith.constant 0 : i32
    return %arg0, %c0_i32, %c0_i32_0 : i32, i32, i32
  }
  func.func @transform_1(%arg0: i32) -> (i32, i32, i32) {
    %c0_i32 = arith.constant 0 : i32
    %c0_i32_0 = arith.constant 0 : i32
    %c0_i32_1 = arith.constant 0 : i32
    return %arg0, %c0_i32, %c0_i32_0 : i32, i32, i32
  }
  func.func @transform_2(%arg0: i32) -> (i32, i32, i32) {
    %c0_i32 = arith.constant 0 : i32
    %c0_i32_0 = arith.constant 0 : i32
    %c0_i32_1 = arith.constant 0 : i32
    return %arg0, %c0_i32, %c0_i32_0 : i32, i32, i32
  }
}

</mosaic_0001>

<llo_original>
// kernel: tpu_custom_call.1
$region0: #{tpu_custom_call.1}
  #allocation0 [shape = 'u32[]', space=smem, size = 0x4, offset = 0x4, fixed_abs, tag = 'smem constant byte address 0x4 - core index']
  #allocation1 [shape = 'u32[72,128]{1,0:T(1,128)}', space=vmem, size = 0x9000, scoped, tag = 'internal scratch']
  %s0 = inlined_call_operand.hbm [shape: f32[2,16,16], index: 0, kind: input, shape index: {}]
  %s1 = inlined_call_operand.hbm [shape: f32[2,16,16], index: 1, kind: input, shape index: {}]
  %s2 = inlined_call_operand.hbm [shape: f32[2,16,16], index: 2, kind: output, shape index: {}]
  %s3 = sld [smem:[#allocation0]]
  $region26: #{tpu_custom_call.1} parent=0
    _
  %s5 = ssub.s32 1, %s3
  %s6 = scalar_select 0, %s5, %s3
  $region1: #{tpu_custom_call.1} parent=0
    #allocation2 [shape = 'u8[16384]{0}', space=vmem, size = 0x4000, scoped, tag = 'input window, operand 0, single buffered']
    #allocation3 [shape = 's32[1]{0}', space=sflag, size = 0x4, scoped, tag = 'scoped memory for tpu_custom_call.1']
    #allocation4 [shape = 's32[1]{0}', space=sflag, size = 0x4, scoped, tag = 'scoped memory for tpu_custom_call.1']
    #allocation5 [shape = 'u8[16384]{0}', space=vmem, size = 0x4000, scoped, tag = 'input window, operand 1, single buffered']
    #allocation6 [shape = 's32[1]{0}', space=sflag, size = 0x4, scoped, tag = 'scoped memory for tpu_custom_call.1']
    #allocation7 [shape = 'u8[16384]{0}', space=vmem, size = 0x4000, scoped, tag = 'output window, operand 0, single buffered']
    %7 = vsyncpa [#allocation3], 0
    %8 = vsyncpa [#allocation6], 0
    %9 = vsyncpa [#allocation4], 0
    // Predicated region
    $region2: #{tpu_custom_call.1} parent=1 // pred_check
      _
    $region3: #{tpu_custom_call.1} parent=1 // pred_check_branch
      %11 = sbr.rel (0) target = $region5
    $region4: #{tpu_custom_call.1} parent=1 // pred_region
      %13 = vsyncadd [#allocation3], 0
      %s14 = sshll.u32 %s0, 4
      %s15 = int_to_ptr.hbm [resolvable:$true] %s14
      %s16 = sshll.u32 [#allocation2], 4
      %s17 = int_to_ptr.vmem [resolvable:$true] %s16
      %22 = dma.hbm_to_vmem [thread:$0]  %s15, 512, %s17, [#allocation3], 128, 128, 8
    $region5: #{tpu_custom_call.1} parent=1 // pred_fallthru
      _
    // Predicated region
    $region6: #{tpu_custom_call.1} parent=1 // pred_check
      _
    $region7: #{tpu_custom_call.1} parent=1 // pred_check_branch
      %24 = sbr.rel (0) target = $region9
    $region8: #{tpu_custom_call.1} parent=1 // pred_region
      %26 = vsyncadd [#allocation6], 0
      %s27 = sshll.u32 %s1, 4
      %s28 = int_to_ptr.hbm [resolvable:$true] %s27
      %s29 = sshll.u32 [#allocation5], 4
      %s30 = int_to_ptr.vmem [resolvable:$true] %s29
      %35 = dma.hbm_to_vmem [thread:$0]  %s28, 512, %s30, [#allocation6], 128, 128, 8
    $region9: #{tpu_custom_call.1} parent=1 // pred_fallthru
      _
    // Predicated region
    $region10: #{tpu_custom_call.1} parent=1 // pred_check
      _
    $region11: #{tpu_custom_call.1} parent=1 // pred_check_branch
      %37 = sbr.rel (0) target = $region13
    $region12: #{tpu_custom_call.1} parent=1 // pred_region
      %39 = dma.done [#allocation3], 512
    $region13: #{tpu_custom_call.1} parent=1 // pred_fallthru
      _
    // Predicated region
    $region14: #{tpu_custom_call.1} parent=1 // pred_check
      _
    $region15: #{tpu_custom_call.1} parent=1 // pred_check_branch
      %41 = sbr.rel (0) target = $region17
    $region16: #{tpu_custom_call.1} parent=1 // pred_region
      %43 = dma.done [#allocation6], 512
    $region17: #{tpu_custom_call.1} parent=1 // pred_fallthru
      _
    %v44 = vld [vmem:[#allocation2] sm:$0xff]
    %v45 = vld [vmem:[#allocation2 + $0x8] sm:$0xff]
    %v46 = vld [vmem:[#allocation2 + $0x10] sm:$0xff]
    %v47 = vld [vmem:[#allocation2 + $0x18] sm:$0xff]
    %v48 = vld [vmem:[#allocation5] sm:$0xff]
    %v49 = vld [vmem:[#allocation5 + $0x8] sm:$0xff]
    %v50 = vld [vmem:[#allocation5 + $0x10] sm:$0xff]
    %v51 = vld [vmem:[#allocation5 + $0x18] sm:$0xff]
    %v52 = vlaneseq
    %v53 = vshrl.u32 %v52, 7
    %v54 = vadd.s32 %v53, 8
    %v55 = vlaneseq
    %v56 = vand.u32 %v55, 127
    %vm57 = vcmp.eq.s32.totalorder %v53, 0
    %vm58 = vcmp.eq.s32.totalorder %v54, 0
    %vm59 = vcmp.eq.s32.totalorder %v53, 15
    %vm60 = vcmp.eq.s32.totalorder %v54, 15
    %vm61 = vcmp.eq.s32.totalorder %v56, 0
    %vm62 = vcmp.eq.s32.totalorder %v56, 15
    %vm63 = vmor %vm57, %vm59
    %vm64 = vmor %vm58, %vm60
    %v65 = vsel %vm63, 1.0, 0.5
    %v66 = vsel %vm64, 1.0, 0.5
    %vm67 = vmor %vm61, %vm62
    %v68 = vsel %vm67, 1.0, 0.5
    %v69 = vrot.slane %v44, 1
    %v70 = vrot.slane %v46, 1
    %v71 = vrot.slane %v45, 1
    %v72 = vrot.slane %v47, 1
    %vm73 = vcmp.lt.s32.totalorder %v53, 7
    %v74 = vsel %vm73, %v69, %v71
    %v75 = vsel %vm73, %v70, %v72
    %v76 = vsel %vm73, %v71, %v69
    %v77 = vsel %vm73, %v72, %v70
    %v78 = vsel %vm59, %v44, %v74
    %v79 = vsel %vm60, %v45, %v76
    %v80 = vsel %vm59, %v46, %v75
    %v81 = vsel %vm60, %v47, %v77
    %v82 = vrot.slane %v44, 7
    %v83 = vrot.slane %v46, 7
    %v84 = vrot.slane %v45, 7
    %v85 = vrot.slane %v47, 7
    %vm86 = vcmp.lt.s32.totalorder %v53, 1
    %v87 = vsel %vm86, %v82, %v84
    %v88 = vsel %vm86, %v83, %v85
    %v89 = vsel %vm86, %v84, %v82
    %v90 = vsel %vm86, %v85, %v83
    %v91 = vsel %vm57, %v44, %v89
    %v92 = vsel %vm58, %v45, %v87
    %v93 = vsel %vm57, %v46, %v90
    %v94 = vsel %vm58, %v47, %v88
    %v95 = vsub.f32 %v78, %v91
    %v96 = vsub.f32 %v79, %v92
    %v97 = vsub.f32 %v80, %v93
    %v98 = vsub.f32 %v81, %v94
    %v99 = vmul.f32 %v95, %v65
    %v100 = vmul.f32 %v96, %v66
    %v101 = vmul.f32 %v97, %v65
    %v102 = vmul.f32 %v98, %v66
    %v103 = vmul.f32 %v99, %v99
    %v104 = vmul.f32 %v100, %v100
    %v105 = vmul.f32 %v101, %v101
    %v106 = vmul.f32 %v102, %v102
    %v107 = vadd.f32 %v103, 1e-06
    %v108 = vadd.f32 %v104, 1e-06
    %v109 = vadd.f32 %v105, 1e-06
    %v110 = vadd.f32 %v106, 1e-06
    %v111 = vpow.f32 %v107, 0.4
    %v112 = vpow.f32 %v108, 0.4
    %v113 = vpow.f32 %v109, 0.4
    %v114 = vpow.f32 %v110, 0.4
    %vm115 = vcmask 1047680
    %116 = vrot.lane.b32.xlu0 %v44, 16
    %v117 = vpop.permute.xlu0 %116
    %v118 = vsel %vm115, %v117, %v44
    %119 = vrot.lane.b32.xlu0 %v45, 16
    %v120 = vpop.permute.xlu0 %119
    %v121 = vsel %vm115, %v120, %v45
    %122 = vrot.lane.b32.xlu0 %v46, 16
    %v123 = vpop.permute.xlu0 %122
    %v124 = vsel %vm115, %v123, %v46
    %125 = vrot.lane.b32.xlu0 %v47, 16
    %v126 = vpop.permute.xlu0 %125
    %v127 = vsel %vm115, %v126, %v47
    %128 = vrot.lane.b32.xlu0 %v118, 16
    %v129 = vpop.permute.xlu0 %128
    %130 = vrot.lane.b32.xlu0 %v121, 16
    %v131 = vpop.permute.xlu0 %130
    %132 = vrot.lane.b32.xlu0 %v124, 16
    %v133 = vpop.permute.xlu0 %132
    %134 = vrot.lane.b32.xlu0 %v127, 16
    %v135 = vpop.permute.xlu0 %134
    %v136 = vsel %vm115, %v129, %v44
    %v137 = vsel %vm115, %v131, %v45
    %v138 = vsel %vm115, %v133, %v46
    %v139 = vsel %vm115, %v135, %v47
    %144 = vrot.lane.b32.xlu0 %v136, 127
    %v145 = vpop.permute.xlu0 %144
    %146 = vrot.lane.b32.xlu0 %v137, 127
    %v147 = vpop.permute.xlu0 %146
    %148 = vrot.lane.b32.xlu0 %v138, 127
    %v149 = vpop.permute.xlu0 %148
    %150 = vrot.lane.b32.xlu0 %v139, 127
    %v151 = vpop.permute.xlu0 %150
    %v156 = vsel %vm62, %v44, %v145
    %v157 = vsel %vm62, %v45, %v147
    %v158 = vsel %vm62, %v46, %v149
    %v159 = vsel %vm62, %v47, %v151
    %160 = vrot.lane.b32.xlu0 %v136, 113
    %v161 = vpop.permute.xlu0 %160
    %162 = vrot.lane.b32.xlu0 %v137, 113
    %v163 = vpop.permute.xlu0 %162
    %164 = vrot.lane.b32.xlu0 %v138, 113
    %v165 = vpop.permute.xlu0 %164
    %166 = vrot.lane.b32.xlu0 %v139, 113
    %v167 = vpop.permute.xlu0 %166
    %v172 = vsel %vm61, %v44, %v161
    %v173 = vsel %vm61, %v45, %v163
    %v174 = vsel %vm61, %v46, %v165
    %v175 = vsel %vm61, %v47, %v167
    %v176 = vsub.f32 %v156, %v172
    %v177 = vsub.f32 %v157, %v173
    %v178 = vsub.f32 %v158, %v174
    %v179 = vsub.f32 %v159, %v175
    %v180 = vmul.f32 %v176, %v68
    %v181 = vmul.f32 %v177, %v68
    %v182 = vmul.f32 %v178, %v68
    %v183 = vmul.f32 %v179, %v68
    %v184 = vmul.f32 %v180, %v180
    %v185 = vmul.f32 %v181, %v181
    %v186 = vmul.f32 %v182, %v182
    %v187 = vmul.f32 %v183, %v183
    %v188 = vadd.f32 %v184, 1e-06
    %v189 = vadd.f32 %v185, 1e-06
    %v190 = vadd.f32 %v186, 1e-06
    %v191 = vadd.f32 %v187, 1e-06
    %v192 = vpow.f32 %v188, 0.4
    %v193 = vpow.f32 %v189, 0.4
    %v194 = vpow.f32 %v190, 0.4
    %v195 = vpow.f32 %v191, 0.4
    %v196 = vadd.f32 %v111, %v192
    %v197 = vadd.f32 %v112, %v193
    %v198 = vadd.f32 %v113, %v194
    %v199 = vadd.f32 %v114, %v195
    %v200 = vrot.slane %v48, 1
    %v201 = vrot.slane %v50, 1
    %v202 = vrot.slane %v49, 1
    %v203 = vrot.slane %v51, 1
    %v204 = vsel %vm73, %v200, %v202
    %v205 = vsel %vm73, %v201, %v203
    %v206 = vsel %vm73, %v202, %v200
    %v207 = vsel %vm73, %v203, %v201
    %v208 = vsel %vm59, %v48, %v204
    %v209 = vsel %vm60, %v49, %v206
    %v210 = vsel %vm59, %v50, %v205
    %v211 = vsel %vm60, %v51, %v207
    %v212 = vrot.slane %v48, 7
    %v213 = vrot.slane %v50, 7
    %v214 = vrot.slane %v49, 7
    %v215 = vrot.slane %v51, 7
    %v216 = vsel %vm86, %v212, %v214
    %v217 = vsel %vm86, %v213, %v215
    %v218 = vsel %vm86, %v214, %v212
    %v219 = vsel %vm86, %v215, %v213
    %v220 = vsel %vm57, %v48, %v218
    %v221 = vsel %vm58, %v49, %v216
    %v222 = vsel %vm57, %v50, %v219
    %v223 = vsel %vm58, %v51, %v217
    %v224 = vsub.f32 %v208, %v220
    %v225 = vsub.f32 %v209, %v221
    %v226 = vsub.f32 %v210, %v222
    %v227 = vsub.f32 %v211, %v223
    %v228 = vmul.f32 %v224, %v65
    %v229 = vmul.f32 %v225, %v66
    %v230 = vmul.f32 %v226, %v65
    %v231 = vmul.f32 %v227, %v66
    %v232 = vmul.f32 %v228, %v228
    %v233 = vmul.f32 %v229, %v229
    %v234 = vmul.f32 %v230, %v230
    %v235 = vmul.f32 %v231, %v231
    %v236 = vadd.f32 %v232, 1e-06
    %v237 = vadd.f32 %v233, 1e-06
    %v238 = vadd.f32 %v234, 1e-06
    %v239 = vadd.f32 %v235, 1e-06
    %v240 = vpow.f32 %v236, 0.4
    %v241 = vpow.f32 %v237, 0.4
    %v242 = vpow.f32 %v238, 0.4
    %v243 = vpow.f32 %v239, 0.4
    %v244 = vadd.f32 %v196, %v240
    %v245 = vadd.f32 %v197, %v241
    %v246 = vadd.f32 %v198, %v242
    %v247 = vadd.f32 %v199, %v243
    %248 = vrot.lane.b32.xlu0 %v48, 16
    %v249 = vpop.permute.xlu0 %248
    %v250 = vsel %vm115, %v249, %v48
    %251 = vrot.lane.b32.xlu0 %v49, 16
    %v252 = vpop.permute.xlu0 %251
    %v253 = vsel %vm115, %v252, %v49
    %254 = vrot.lane.b32.xlu0 %v50, 16
    %v255 = vpop.permute.xlu0 %254
    %v256 = vsel %vm115, %v255, %v50
    %257 = vrot.lane.b32.xlu0 %v51, 16
    %v258 = vpop.permute.xlu0 %257
    %v259 = vsel %vm115, %v258, %v51
    %260 = vrot.lane.b32.xlu0 %v250, 16
    %v261 = vpop.permute.xlu0 %260
    %262 = vrot.lane.b32.xlu0 %v253, 16
    %v263 = vpop.permute.xlu0 %262
    %264 = vrot.lane.b32.xlu0 %v256, 16
    %v265 = vpop.permute.xlu0 %264
    %266 = vrot.lane.b32.xlu0 %v259, 16
    %v267 = vpop.permute.xlu0 %266
    %v268 = vsel %vm115, %v261, %v48
    %v269 = vsel %vm115, %v263, %v49
    %v270 = vsel %vm115, %v265, %v50
    %v271 = vsel %vm115, %v267, %v51
    %276 = vrot.lane.b32.xlu0 %v268, 127
    %v277 = vpop.permute.xlu0 %276
    %278 = vrot.lane.b32.xlu0 %v269, 127
    %v279 = vpop.permute.xlu0 %278
    %280 = vrot.lane.b32.xlu0 %v270, 127
    %v281 = vpop.permute.xlu0 %280
    %282 = vrot.lane.b32.xlu0 %v271, 127
    %v283 = vpop.permute.xlu0 %282
    %v288 = vsel %vm62, %v48, %v277
    %v289 = vsel %vm62, %v49, %v279
    %v290 = vsel %vm62, %v50, %v281
    %v291 = vsel %vm62, %v51, %v283
    %292 = vrot.lane.b32.xlu0 %v268, 113
    %v293 = vpop.permute.xlu0 %292
    %294 = vrot.lane.b32.xlu0 %v269, 113
    %v295 = vpop.permute.xlu0 %294
    %296 = vrot.lane.b32.xlu0 %v270, 113
    %v297 = vpop.permute.xlu0 %296
    %298 = vrot.lane.b32.xlu0 %v271, 113
    %v299 = vpop.permute.xlu0 %298
    %v304 = vsel %vm61, %v48, %v293
    %v305 = vsel %vm61, %v49, %v295
    %v306 = vsel %vm61, %v50, %v297
    %v307 = vsel %vm61, %v51, %v299
    %v308 = vsub.f32 %v288, %v304
    %v309 = vsub.f32 %v289, %v305
    %v310 = vsub.f32 %v290, %v306
    %v311 = vsub.f32 %v291, %v307
    %v312 = vmul.f32 %v308, %v68
    %v313 = vmul.f32 %v309, %v68
    %v314 = vmul.f32 %v310, %v68
    %v315 = vmul.f32 %v311, %v68
    %v316 = vmul.f32 %v312, %v312
    %v317 = vmul.f32 %v313, %v313
    %v318 = vmul.f32 %v314, %v314
    %v319 = vmul.f32 %v315, %v315
    %v320 = vadd.f32 %v316, 1e-06
    %v321 = vadd.f32 %v317, 1e-06
    %v322 = vadd.f32 %v318, 1e-06
    %v323 = vadd.f32 %v319, 1e-06
    %v324 = vpow.f32 %v320, 0.4
    %v325 = vpow.f32 %v321, 0.4
    %v326 = vpow.f32 %v322, 0.4
    %v327 = vpow.f32 %v323, 0.4
    %v328 = vadd.f32 %v244, %v324
    %v329 = vadd.f32 %v245, %v325
    %v330 = vadd.f32 %v246, %v326
    %v331 = vadd.f32 %v247, %v327
    %vm332 = vcmask 130048
    %333 = vst.msk [vmem:[#allocation7] sm:$0xff] %vm332, %v328
    %334 = vst.msk [vmem:[#allocation7 + $0x8] sm:$0xff] %vm332, %v329
    %335 = vst.msk [vmem:[#allocation7 + $0x10] sm:$0xff] %vm332, %v330
    %336 = vst.msk [vmem:[#allocation7 + $0x18] sm:$0xff] %vm332, %v331
    // Predicated region
    $region18: #{tpu_custom_call.1} parent=1 // pred_check
      _
    $region19: #{tpu_custom_call.1} parent=1 // pred_check_branch
      %338 = sbr.rel (0) target = $region21
    $region20: #{tpu_custom_call.1} parent=1 // pred_region
      %340 = vsyncadd [#allocation4], 0
      %s341 = sshll.u32 [#allocation7], 4
      %s342 = int_to_ptr.vmem [resolvable:$true] %s341
      %s343 = sshll.u32 %s2, 4
      %s344 = int_to_ptr.hbm [resolvable:$true] %s343
      %349 = dma.vmem_to_hbm [thread:$0]  %s342, 512, %s344, [#allocation4], 128, 128, 8
    $region21: #{tpu_custom_call.1} parent=1 // pred_fallthru
      _
    // Predicated region
    $region22: #{tpu_custom_call.1} parent=1 // pred_check
      _
    $region23: #{tpu_custom_call.1} parent=1 // pred_check_branch
      %351 = sbr.rel (0) target = $region25
    $region24: #{tpu_custom_call.1} parent=1 // pred_region
      %353 = dma.done [#allocation4], 512
    $region25: #{tpu_custom_call.1} parent=1 // pred_fallthru
      _
    %354 = vsyncpa [#allocation3], 1
    %355 = vsyncpa [#allocation6], 1
    %356 = vsyncpa [#allocation4], 1

</llo_original>
